<compile_context>
chip_gen: v5e
topology: v5e:2x2
jax: 0.10.0
libtpu: 0.0.40
codegen_flags: <defaults>
</compile_context>

<pallas_src>
import jax
import jax.numpy as jnp
from jax import lax
from jax.experimental import pallas as pl
from jax.experimental.pallas import tpu as pltpu


def lstm_lm_kernel(embeds_ref, h0_ref, c0_ref,
                   w_ih_ref, w_hh_ref, b_ref,
                   w_lin_ref, b_lin_ref,
                   out_ref, h_out_ref, c_out_ref):
    S = embeds_ref.shape[0]
    H = h0_ref.shape[1]

    # --- (1) Hoisted input-to-hidden projection: one (S,E)@(E,4H) MXU call,
    #         result held in vregs (no scratch round-trip). ---
    zx = (jnp.dot(embeds_ref[...], w_ih_ref[...],
                  preferred_element_type=jnp.float32)
          + b_ref[...])                                            # (S, 4H)

    w_hh = w_hh_ref[...]                                           # (H, 4H)

    # Row-id mask for scattering h_t into a loop-carried (S,H) value with a
    # VPU select instead of a per-step masked store.
    row_ids = lax.broadcasted_iota(jnp.int32, (S, H), 0)

    # --- (2) Sequential recurrence: h @ W_hh + gate math per step. Fully
    #         unrolled static loop (S is small & static) so all slices are
    #         static and the LLO scheduler sees the whole chain. ---
    # TODO(synk): for long sequences use lax.fori_loop(..., unroll=8) instead
    # of full unroll to bound code size / live ranges.
    h = h0_ref[...]                                                # (1, H)
    c = c0_ref[...]                                                # (1, H)
    h_all = jnp.zeros((S, H), jnp.float32)
    for t in range(S):
        z = zx[t:t + 1, :] + jnp.dot(h, w_hh,
                                     preferred_element_type=jnp.float32)
        # Two full-width EUP pushes on the (1, 4H) vreg, then lane slices.
        # Gate column order matches PyTorch: [i | f | g | o].
        sg = jax.nn.sigmoid(z)                                     # (1, 4H)
        th = jnp.tanh(z)                                           # (1, 4H)
        i = sg[:, 0:H]
        f = sg[:, H:2 * H]
        g = th[:, 2 * H:3 * H]
        o = sg[:, 3 * H:4 * H]
        c = f * c + i * g
        h = o * jnp.tanh(c)
        h_all = jnp.where(row_ids == t, h, h_all)                  # vreg select

    h_out_ref[...] = h
    c_out_ref[...] = c

    # --- (3) Batched vocab projection + log-softmax, one lane-dense store. ---
    logits = (jnp.dot(h_all, w_lin_ref[...],
                      preferred_element_type=jnp.float32)
              + b_lin_ref[...])                                    # (S, Vp)
    m = jnp.max(logits, axis=1, keepdims=True)
    # Padded vocab columns carry a -1e30 f32 bias -> they never win the max and
    # exp underflows to exactly 0, so the LSE over the padded width is exact
    # for the real columns (only valid because logits stay f32).
    lse = jnp.log(jnp.sum(jnp.exp(logits - m), axis=1, keepdims=True)) + m
    # TODO(synk): nn.Dropout(0.1) is identity in eval mode; training-mode
    # stochastic dropout is not reproduced here.
    out_ref[...] = logits - lse


def lstm_lm_forward(token_ids, hidden, params):
    """Mirrors LSTM.forward(input, hidden) of the PyTorch module (eval mode).

    token_ids: (S,) int32
    hidden:    (h0, c0), each (1, 1, H) float32
    returns:   (logprobs (S, V), (h_T (1,1,H), c_T (1,1,H)))
    """
    embed_tbl = params["embed"]                     # (V, E)
    S = token_ids.shape[0]
    E = embed_tbl.shape[1]
    H = params["w_hh"].shape[1]                     # w_hh: (4H, H)
    V = params["w_lin"].shape[0]                    # w_lin: (V, H)
    Vp = ((V + 127) // 128) * 128                   # lane-dense output width

    # Glue: embedding gather + weight transposes to (in, out) layout.
    # TODO(synk): at large S/E the gather could move in-kernel via
    # PrefetchScalarGridSpec(num_scalar_prefetch=1) + pl.Element row indexing.
    embeds = jnp.take(embed_tbl, token_ids, axis=0).astype(jnp.float32)  # (S, E)
    w_ih_t = params["w_ih"].T.astype(jnp.float32)                        # (E, 4H)
    w_hh_t = params["w_hh"].T.astype(jnp.float32)                        # (H, 4H)
    b = (params["b_ih"] + params["b_hh"]).reshape(1, 4 * H).astype(jnp.float32)

    # Pad vocab dim to a multiple of 128 (lane-dense stores). Padded columns
    # get zero weights and a -1e30 bias so they vanish from the softmax.
    w_lin_t = jnp.zeros((H, Vp), jnp.float32).at[:, :V].set(
        params["w_lin"].T.astype(jnp.float32))
    b_lin = jnp.full((1, Vp), -1e30, jnp.float32).at[0, :V].set(
        params["b_lin"].astype(jnp.float32))

    h0 = hidden[0].reshape(1, H).astype(jnp.float32)
    c0 = hidden[1].reshape(1, H).astype(jnp.float32)

    vmem = pl.BlockSpec(memory_space=pltpu.MemorySpace.VMEM)

    # HBM traffic (bytes): inputs + outputs only (no scratch anymore).
    io_bytes = 4 * (embeds.size + h0.size + c0.size + w_ih_t.size + w_hh_t.size
                    + b.size + w_lin_t.size + b_lin.size
                    + S * Vp + 2 * H)              # outputs
    vmem_limit = int(max(4 * 1024 * 1024, 4 * io_bytes))

    cost = pl.CostEstimate(
        flops=2 * S * (E * 4 * H + H * 4 * H + H * Vp),
        transcendentals=S * (2 * 4 * H + H) + S * Vp,
        bytes_accessed=int(io_bytes),
    )

    out_p, h_t, c_t = pl.pallas_call(
        lstm_lm_kernel,
        out_shape=(
            jax.ShapeDtypeStruct((S, Vp), jnp.float32),
            jax.ShapeDtypeStruct((1, H), jnp.float32),
            jax.ShapeDtypeStruct((1, H), jnp.float32),
        ),
        in_specs=[vmem] * 8,
        out_specs=(vmem, vmem, vmem),
        compiler_params=pltpu.CompilerParams(vmem_limit_bytes=vmem_limit),
        cost_estimate=cost,
    )(embeds, h0, c0, w_ih_t, w_hh_t, b, w_lin_t, b_lin)

    out = out_p[:, :V]
    return out, (h_t.reshape(1, 1, H), c_t.reshape(1, 1, H))


def _reference_forward(token_ids, hidden, params):
    """Pure-JAX reference (matches PyTorch eval-mode semantics)."""
    H = params["w_hh"].shape[1]
    embeds = jnp.take(params["embed"], token_ids, axis=0)
    h = hidden[0].reshape(1, H)
    c = hidden[1].reshape(1, H)
    w_ih_t, w_hh_t = params["w_ih"].T, params["w_hh"].T
    b = (params["b_ih"] + params["b_hh"]).reshape(1, -1)
    outs = []
    for t in range(embeds.shape[0]):
        z = embeds[t:t + 1] @ w_ih_t + h @ w_hh_t + b
        i = jax.nn.sigmoid(z[:, 0:H])
        f = jax.nn.sigmoid(z[:, H:2 * H])
        g = jnp.tanh(z[:, 2 * H:3 * H])
        o = jax.nn.sigmoid(z[:, 3 * H:4 * H])
        c = f * c + i * g
        h = o * jnp.tanh(c)
        outs.append(h)
    lstm_out = jnp.concatenate(outs, axis=0)
    logits = lstm_out @ params["w_lin"].T + params["b_lin"][None, :]
    logp = jax.nn.log_softmax(logits, axis=1)
    return logp, (h, c)


if __name__ == "__main__":
    # Module hyperparameters (small, consistent with the forward pass).
    V = 64   # input_dim (vocab size)
    E = 16   # embed_dim
    H = 32   # hidden_dim
    S = 8    # sequence length (len(input)); batch is fixed to 1 by the module

    key = jax.random.PRNGKey(0)
    ks = jax.random.split(key, 8)
    bound = 1.0 / jnp.sqrt(H)
    params = {
        "embed": jax.random.normal(ks[0], (V, E), jnp.float32),
        "w_ih": jax.random.uniform(ks[1], (4 * H, E), jnp.float32, -bound, bound),
        "w_hh": jax.random.uniform(ks[2], (4 * H, H), jnp.float32, -bound, bound),
        "b_ih": jax.random.uniform(ks[3], (4 * H,), jnp.float32, -bound, bound),
        "b_hh": jax.random.uniform(ks[4], (4 * H,), jnp.float32, -bound, bound),
        "w_lin": jax.random.uniform(ks[5], (V, H), jnp.float32, -bound, bound),
        "b_lin": jax.random.uniform(ks[6], (V,), jnp.float32, -bound, bound),
    }

    token_ids = jax.random.randint(ks[7], (S,), 0, V, dtype=jnp.int32)
    # initHidden(): zeros of shape (1, 1, hidden_dim)
    hidden0 = (jnp.zeros((1, 1, H), jnp.float32), jnp.zeros((1, 1, H), jnp.float32))

    out, (h_t, c_t) = lstm_lm_forward(token_ids, hidden0, params)
    jax.block_until_ready((out, h_t, c_t))

    ref_out, (ref_h, ref_c) = _reference_forward(token_ids, hidden0, params)
    assert out.shape == (S, V)
    assert jnp.allclose(out, ref_out, atol=2e-4, rtol=2e-4)
    assert jnp.allclose(h_t.reshape(1, H), ref_h, atol=2e-4, rtol=2e-4)
    assert jnp.allclose(c_t.reshape(1, H), ref_c, atol=2e-4, rtol=2e-4)

    print("KERNEL_OK")
</pallas_src>

<mosaic_0001>
module attributes {stable_mosaic.version = 11 : i64} {
  func.func @lstm_lm_kernel(%arg0: memref<8x16xf32, #tpu.memory_space<vmem>>, %arg1: memref<1x32xf32, #tpu.memory_space<vmem>>, %arg2: memref<1x32xf32, #tpu.memory_space<vmem>>, %arg3: memref<16x128xf32, #tpu.memory_space<vmem>>, %arg4: memref<32x128xf32, #tpu.memory_space<vmem>>, %arg5: memref<1x128xf32, #tpu.memory_space<vmem>>, %arg6: memref<32x128xf32, #tpu.memory_space<vmem>>, %arg7: memref<1x128xf32, #tpu.memory_space<vmem>>, %arg8: memref<8x128xf32, #tpu.memory_space<vmem>>, %arg9: memref<1x32xf32, #tpu.memory_space<vmem>>, %arg10: memref<1x32xf32, #tpu.memory_space<vmem>>) attributes {dimension_semantics = [], scalar_prefetch = 0 : i64, scratch_operands = 0 : i64, tpu.core_type = #tpu.core_type<tc>} {
    %c0 = arith.constant 0 : index
    %c0_0 = arith.constant 0 : index
    %0 = vector.load %arg0[%c0, %c0_0] : memref<8x16xf32, #tpu.memory_space<vmem>>, vector<8x16xf32>
    %c0_1 = arith.constant 0 : index
    %c0_2 = arith.constant 0 : index
    %1 = vector.load %arg3[%c0_1, %c0_2] : memref<16x128xf32, #tpu.memory_space<vmem>>, vector<16x128xf32>
    %cst = arith.constant dense<0.000000e+00> : vector<8x128xf32>
    %2 = tpu.matmul %0, %1, %cst {dimension_numbers = #tpu.dot_dimension_numbers<[1], [0], [0], [1], [0, 0, 1, 1], [], []>} : vector<8x16xf32>, vector<16x128xf32>, vector<8x128xf32> -> vector<8x128xf32>
    %c0_3 = arith.constant 0 : index
    %c0_4 = arith.constant 0 : index
    %3 = vector.load %arg5[%c0_3, %c0_4] : memref<1x128xf32, #tpu.memory_space<vmem>>, vector<1x128xf32>
    %4 = vector.broadcast %3 : vector<1x128xf32> to vector<8x128xf32>
    %5 = arith.addf %2, %4 : vector<8x128xf32>
    %c0_5 = arith.constant 0 : index
    %c0_6 = arith.constant 0 : index
    %6 = vector.load %arg4[%c0_5, %c0_6] : memref<32x128xf32, #tpu.memory_space<vmem>>, vector<32x128xf32>
    %7 = tpu.iota {dimensions = array<i32: 0>} : vector<8x32xi32>
    %c0_7 = arith.constant 0 : index
    %c0_8 = arith.constant 0 : index
    %8 = vector.load %arg1[%c0_7, %c0_8] : memref<1x32xf32, #tpu.memory_space<vmem>>, vector<1x32xf32>
    %c0_9 = arith.constant 0 : index
    %c0_10 = arith.constant 0 : index
    %9 = vector.load %arg2[%c0_9, %c0_10] : memref<1x32xf32, #tpu.memory_space<vmem>>, vector<1x32xf32>
    %cst_11 = arith.constant 0.000000e+00 : f32
    %10 = vector.broadcast %cst_11 : f32 to vector<8x32xf32>
    %11 = vector.extract_strided_slice %5 {offsets = [0, 0], sizes = [1, 128], strides = [1, 1]} : vector<8x128xf32> to vector<1x128xf32>
    %cst_12 = arith.constant dense<0.000000e+00> : vector<1x128xf32>
    %12 = tpu.matmul %8, %6, %cst_12 {dimension_numbers = #tpu.dot_dimension_numbers<[1], [0], [0], [1], [0, 0, 1, 1], [], []>} : vector<1x32xf32>, vector<32x128xf32>, vector<1x128xf32> -> vector<1x128xf32>
    %13 = arith.addf %11, %12 : vector<1x128xf32>
    %14 = arith.negf %13 : vector<1x128xf32>
    %15 = math.exp %14 : vector<1x128xf32>
    %cst_13 = arith.constant 1.000000e+00 : f32
    %16 = vector.broadcast %cst_13 : f32 to vector<1x128xf32>
    %17 = arith.addf %16, %15 : vector<1x128xf32>
    %18 = arith.divf %16, %17 : vector<1x128xf32>
    %19 = math.tanh %13 : vector<1x128xf32>
    %20 = vector.extract_strided_slice %18 {offsets = [0, 0], sizes = [1, 32], strides = [1, 1]} : vector<1x128xf32> to vector<1x32xf32>
    %21 = vector.extract_strided_slice %18 {offsets = [0, 32], sizes = [1, 32], strides = [1, 1]} : vector<1x128xf32> to vector<1x32xf32>
    %22 = vector.extract_strided_slice %19 {offsets = [0, 64], sizes = [1, 32], strides = [1, 1]} : vector<1x128xf32> to vector<1x32xf32>
    %23 = vector.extract_strided_slice %18 {offsets = [0, 96], sizes = [1, 32], strides = [1, 1]} : vector<1x128xf32> to vector<1x32xf32>
    %24 = arith.mulf %21, %9 : vector<1x32xf32>
    %25 = arith.mulf %20, %22 : vector<1x32xf32>
    %26 = arith.addf %24, %25 : vector<1x32xf32>
    %27 = math.tanh %26 : vector<1x32xf32>
    %28 = arith.mulf %23, %27 : vector<1x32xf32>
    %c0_i32 = arith.constant 0 : i32
    %29 = vector.broadcast %c0_i32 : i32 to vector<8x32xi32>
    %30 = arith.cmpi eq, %7, %29 : vector<8x32xi32>
    %31 = vector.shape_cast %28 : vector<1x32xf32> to vector<1x32xf32>
    %32 = vector.broadcast %31 : vector<1x32xf32> to vector<8x32xf32>
    %33 = arith.select %30, %32, %10 : vector<8x32xi1>, vector<8x32xf32>
    %34 = vector.extract_strided_slice %5 {offsets = [1, 0], sizes = [1, 128], strides = [1, 1]} : vector<8x128xf32> to vector<1x128xf32>
    %cst_14 = arith.constant dense<0.000000e+00> : vector<1x128xf32>
    %35 = tpu.matmul %28, %6, %cst_14 {dimension_numbers = #tpu.dot_dimension_numbers<[1], [0], [0], [1], [0, 0, 1, 1], [], []>} : vector<1x32xf32>, vector<32x128xf32>, vector<1x128xf32> -> vector<1x128xf32>
    %36 = arith.addf %34, %35 : vector<1x128xf32>
    %37 = arith.negf %36 : vector<1x128xf32>
    %38 = math.exp %37 : vector<1x128xf32>
    %cst_15 = arith.constant 1.000000e+00 : f32
    %39 = vector.broadcast %cst_15 : f32 to vector<1x128xf32>
    %40 = arith.addf %39, %38 : vector<1x128xf32>
    %41 = arith.divf %39, %40 : vector<1x128xf32>
    %42 = math.tanh %36 : vector<1x128xf32>
    %43 = vector.extract_strided_slice %41 {offsets = [0, 0], sizes = [1, 32], strides = [1, 1]} : vector<1x128xf32> to vector<1x32xf32>
    %44 = vector.extract_strided_slice %41 {offsets = [0, 32], sizes = [1, 32], strides = [1, 1]} : vector<1x128xf32> to vector<1x32xf32>
    %45 = vector.extract_strided_slice %42 {offsets = [0, 64], sizes = [1, 32], strides = [1, 1]} : vector<1x128xf32> to vector<1x32xf32>
    %46 = vector.extract_strided_slice %41 {offsets = [0, 96], sizes = [1, 32], strides = [1, 1]} : vector<1x128xf32> to vector<1x32xf32>
    %47 = arith.mulf %44, %26 : vector<1x32xf32>
    %48 = arith.mulf %43, %45 : vector<1x32xf32>
    %49 = arith.addf %47, %48 : vector<1x32xf32>
    %50 = math.tanh %49 : vector<1x32xf32>
    %51 = arith.mulf %46, %50 : vector<1x32xf32>
    %c1_i32 = arith.constant 1 : i32
    %52 = vector.broadcast %c1_i32 : i32 to vector<8x32xi32>
    %53 = arith.cmpi eq, %7, %52 : vector<8x32xi32>
    %54 = vector.shape_cast %51 : vector<1x32xf32> to vector<1x32xf32>
    %55 = vector.broadcast %54 : vector<1x32xf32> to vector<8x32xf32>
    %56 = arith.select %53, %55, %33 : vector<8x32xi1>, vector<8x32xf32>
    %57 = vector.extract_strided_slice %5 {offsets = [2, 0], sizes = [1, 128], strides = [1, 1]} : vector<8x128xf32> to vector<1x128xf32>
    %cst_16 = arith.constant dense<0.000000e+00> : vector<1x128xf32>
    %58 = tpu.matmul %51, %6, %cst_16 {dimension_numbers = #tpu.dot_dimension_numbers<[1], [0], [0], [1], [0, 0, 1, 1], [], []>} : vector<1x32xf32>, vector<32x128xf32>, vector<1x128xf32> -> vector<1x128xf32>
    %59 = arith.addf %57, %58 : vector<1x128xf32>
    %60 = arith.negf %59 : vector<1x128xf32>
    %61 = math.exp %60 : vector<1x128xf32>
    %cst_17 = arith.constant 1.000000e+00 : f32
    %62 = vector.broadcast %cst_17 : f32 to vector<1x128xf32>
    %63 = arith.addf %62, %61 : vector<1x128xf32>
    %64 = arith.divf %62, %63 : vector<1x128xf32>
    %65 = math.tanh %59 : vector<1x128xf32>
    %66 = vector.extract_strided_slice %64 {offsets = [0, 0], sizes = [1, 32], strides = [1, 1]} : vector<1x128xf32> to vector<1x32xf32>
    %67 = vector.extract_strided_slice %64 {offsets = [0, 32], sizes = [1, 32], strides = [1, 1]} : vector<1x128xf32> to vector<1x32xf32>
    %68 = vector.extract_strided_slice %65 {offsets = [0, 64], sizes = [1, 32], strides = [1, 1]} : vector<1x128xf32> to vector<1x32xf32>
    %69 = vector.extract_strided_slice %64 {offsets = [0, 96], sizes = [1, 32], strides = [1, 1]} : vector<1x128xf32> to vector<1x32xf32>
    %70 = arith.mulf %67, %49 : vector<1x32xf32>
    %71 = arith.mulf %66, %68 : vector<1x32xf32>
    %72 = arith.addf %70, %71 : vector<1x32xf32>
    %73 = math.tanh %72 : vector<1x32xf32>
    %74 = arith.mulf %69, %73 : vector<1x32xf32>
    %c2_i32 = arith.constant 2 : i32
    %75 = vector.broadcast %c2_i32 : i32 to vector<8x32xi32>
    %76 = arith.cmpi eq, %7, %75 : vector<8x32xi32>
    %77 = vector.shape_cast %74 : vector<1x32xf32> to vector<1x32xf32>
    %78 = vector.broadcast %77 : vector<1x32xf32> to vector<8x32xf32>
    %79 = arith.select %76, %78, %56 : vector<8x32xi1>, vector<8x32xf32>
    %80 = vector.extract_strided_slice %5 {offsets = [3, 0], sizes = [1, 128], strides = [1, 1]} : vector<8x128xf32> to vector<1x128xf32>
    %cst_18 = arith.constant dense<0.000000e+00> : vector<1x128xf32>
    %81 = tpu.matmul %74, %6, %cst_18 {dimension_numbers = #tpu.dot_dimension_numbers<[1], [0], [0], [1], [0, 0, 1, 1], [], []>} : vector<1x32xf32>, vector<32x128xf32>, vector<1x128xf32> -> vector<1x128xf32>
    %82 = arith.addf %80, %81 : vector<1x128xf32>
    %83 = arith.negf %82 : vector<1x128xf32>
    %84 = math.exp %83 : vector<1x128xf32>
    %cst_19 = arith.constant 1.000000e+00 : f32
    %85 = vector.broadcast %cst_19 : f32 to vector<1x128xf32>
    %86 = arith.addf %85, %84 : vector<1x128xf32>
    %87 = arith.divf %85, %86 : vector<1x128xf32>
    %88 = math.tanh %82 : vector<1x128xf32>
    %89 = vector.extract_strided_slice %87 {offsets = [0, 0], sizes = [1, 32], strides = [1, 1]} : vector<1x128xf32> to vector<1x32xf32>
    %90 = vector.extract_strided_slice %87 {offsets = [0, 32], sizes = [1, 32], strides = [1, 1]} : vector<1x128xf32> to vector<1x32xf32>
    %91 = vector.extract_strided_slice %88 {offsets = [0, 64], sizes = [1, 32], strides = [1, 1]} : vector<1x128xf32> to vector<1x32xf32>
    %92 = vector.extract_strided_slice %87 {offsets = [0, 96], sizes = [1, 32], strides = [1, 1]} : vector<1x128xf32> to vector<1x32xf32>
    %93 = arith.mulf %90, %72 : vector<1x32xf32>
    %94 = arith.mulf %89, %91 : vector<1x32xf32>
    %95 = arith.addf %93, %94 : vector<1x32xf32>
    %96 = math.tanh %95 : vector<1x32xf32>
    %97 = arith.mulf %92, %96 : vector<1x32xf32>
    %c3_i32 = arith.constant 3 : i32
    %98 = vector.broadcast %c3_i32 : i32 to vector<8x32xi32>
    %99 = arith.cmpi eq, %7, %98 : vector<8x32xi32>
    %100 = vector.shape_cast %97 : vector<1x32xf32> to vector<1x32xf32>
    %101 = vector.broadcast %100 : vector<1x32xf32> to vector<8x32xf32>
    %102 = arith.select %99, %101, %79 : vector<8x32xi1>, vector<8x32xf32>
    %103 = vector.extract_strided_slice %5 {offsets = [4, 0], sizes = [1, 128], strides = [1, 1]} : vector<8x128xf32> to vector<1x128xf32>
    %cst_20 = arith.constant dense<0.000000e+00> : vector<1x128xf32>
    %104 = tpu.matmul %97, %6, %cst_20 {dimension_numbers = #tpu.dot_dimension_numbers<[1], [0], [0], [1], [0, 0, 1, 1], [], []>} : vector<1x32xf32>, vector<32x128xf32>, vector<1x128xf32> -> vector<1x128xf32>
    %105 = arith.addf %103, %104 : vector<1x128xf32>
    %106 = arith.negf %105 : vector<1x128xf32>
    %107 = math.exp %106 : vector<1x128xf32>
    %cst_21 = arith.constant 1.000000e+00 : f32
    %108 = vector.broadcast %cst_21 : f32 to vector<1x128xf32>
    %109 = arith.addf %108, %107 : vector<1x128xf32>
    %110 = arith.divf %108, %109 : vector<1x128xf32>
    %111 = math.tanh %105 : vector<1x128xf32>
    %112 = vector.extract_strided_slice %110 {offsets = [0, 0], sizes = [1, 32], strides = [1, 1]} : vector<1x128xf32> to vector<1x32xf32>
    %113 = vector.extract_strided_slice %110 {offsets = [0, 32], sizes = [1, 32], strides = [1, 1]} : vector<1x128xf32> to vector<1x32xf32>
    %114 = vector.extract_strided_slice %111 {offsets = [0, 64], sizes = [1, 32], strides = [1, 1]} : vector<1x128xf32> to vector<1x32xf32>
    %115 = vector.extract_strided_slice %110 {offsets = [0, 96], sizes = [1, 32], strides = [1, 1]} : vector<1x128xf32> to vector<1x32xf32>
    %116 = arith.mulf %113, %95 : vector<1x32xf32>
    %117 = arith.mulf %112, %114 : vector<1x32xf32>
    %118 = arith.addf %116, %117 : vector<1x32xf32>
    %119 = math.tanh %118 : vector<1x32xf32>
    %120 = arith.mulf %115, %119 : vector<1x32xf32>
    %c4_i32 = arith.constant 4 : i32
    %121 = vector.broadcast %c4_i32 : i32 to vector<8x32xi32>
    %122 = arith.cmpi eq, %7, %121 : vector<8x32xi32>
    %123 = vector.shape_cast %120 : vector<1x32xf32> to vector<1x32xf32>
    %124 = vector.broadcast %123 : vector<1x32xf32> to vector<8x32xf32>
    %125 = arith.select %122, %124, %102 : vector<8x32xi1>, vector<8x32xf32>
    %126 = vector.extract_strided_slice %5 {offsets = [5, 0], sizes = [1, 128], strides = [1, 1]} : vector<8x128xf32> to vector<1x128xf32>
    %cst_22 = arith.constant dense<0.000000e+00> : vector<1x128xf32>
    %127 = tpu.matmul %120, %6, %cst_22 {dimension_numbers = #tpu.dot_dimension_numbers<[1], [0], [0], [1], [0, 0, 1, 1], [], []>} : vector<1x32xf32>, vector<32x128xf32>, vector<1x128xf32> -> vector<1x128xf32>
    %128 = arith.addf %126, %127 : vector<1x128xf32>
    %129 = arith.negf %128 : vector<1x128xf32>
    %130 = math.exp %129 : vector<1x128xf32>
    %cst_23 = arith.constant 1.000000e+00 : f32
    %131 = vector.broadcast %cst_23 : f32 to vector<1x128xf32>
    %132 = arith.addf %131, %130 : vector<1x128xf32>
    %133 = arith.divf %131, %132 : vector<1x128xf32>
    %134 = math.tanh %128 : vector<1x128xf32>
    %135 = vector.extract_strided_slice %133 {offsets = [0, 0], sizes = [1, 32], strides = [1, 1]} : vector<1x128xf32> to vector<1x32xf32>
    %136 = vector.extract_strided_slice %133 {offsets = [0, 32], sizes = [1, 32], strides = [1, 1]} : vector<1x128xf32> to vector<1x32xf32>
    %137 = vector.extract_strided_slice %134 {offsets = [0, 64], sizes = [1, 32], strides = [1, 1]} : vector<1x128xf32> to vector<1x32xf32>
    %138 = vector.extract_strided_slice %133 {offsets = [0, 96], sizes = [1, 32], strides = [1, 1]} : vector<1x128xf32> to vector<1x32xf32>
    %139 = arith.mulf %136, %118 : vector<1x32xf32>
    %140 = arith.mulf %135, %137 : vector<1x32xf32>
    %141 = arith.addf %139, %140 : vector<1x32xf32>
    %142 = math.tanh %141 : vector<1x32xf32>
    %143 = arith.mulf %138, %142 : vector<1x32xf32>
    %c5_i32 = arith.constant 5 : i32
    %144 = vector.broadcast %c5_i32 : i32 to vector<8x32xi32>
    %145 = arith.cmpi eq, %7, %144 : vector<8x32xi32>
    %146 = vector.shape_cast %143 : vector<1x32xf32> to vector<1x32xf32>
    %147 = vector.broadcast %146 : vector<1x32xf32> to vector<8x32xf32>
    %148 = arith.select %145, %147, %125 : vector<8x32xi1>, vector<8x32xf32>
    %149 = vector.extract_strided_slice %5 {offsets = [6, 0], sizes = [1, 128], strides = [1, 1]} : vector<8x128xf32> to vector<1x128xf32>
    %cst_24 = arith.constant dense<0.000000e+00> : vector<1x128xf32>
    %150 = tpu.matmul %143, %6, %cst_24 {dimension_numbers = #tpu.dot_dimension_numbers<[1], [0], [0], [1], [0, 0, 1, 1], [], []>} : vector<1x32xf32>, vector<32x128xf32>, vector<1x128xf32> -> vector<1x128xf32>
    %151 = arith.addf %149, %150 : vector<1x128xf32>
    %152 = arith.negf %151 : vector<1x128xf32>
    %153 = math.exp %152 : vector<1x128xf32>
    %cst_25 = arith.constant 1.000000e+00 : f32
    %154 = vector.broadcast %cst_25 : f32 to vector<1x128xf32>
    %155 = arith.addf %154, %153 : vector<1x128xf32>
    %156 = arith.divf %154, %155 : vector<1x128xf32>
    %157 = math.tanh %151 : vector<1x128xf32>
    %158 = vector.extract_strided_slice %156 {offsets = [0, 0], sizes = [1, 32], strides = [1, 1]} : vector<1x128xf32> to vector<1x32xf32>
    %159 = vector.extract_strided_slice %156 {offsets = [0, 32], sizes = [1, 32], strides = [1, 1]} : vector<1x128xf32> to vector<1x32xf32>
    %160 = vector.extract_strided_slice %157 {offsets = [0, 64], sizes = [1, 32], strides = [1, 1]} : vector<1x128xf32> to vector<1x32xf32>
    %161 = vector.extract_strided_slice %156 {offsets = [0, 96], sizes = [1, 32], strides = [1, 1]} : vector<1x128xf32> to vector<1x32xf32>
    %162 = arith.mulf %159, %141 : vector<1x32xf32>
    %163 = arith.mulf %158, %160 : vector<1x32xf32>
    %164 = arith.addf %162, %163 : vector<1x32xf32>
    %165 = math.tanh %164 : vector<1x32xf32>
    %166 = arith.mulf %161, %165 : vector<1x32xf32>
    %c6_i32 = arith.constant 6 : i32
    %167 = vector.broadcast %c6_i32 : i32 to vector<8x32xi32>
    %168 = arith.cmpi eq, %7, %167 : vector<8x32xi32>
    %169 = vector.shape_cast %166 : vector<1x32xf32> to vector<1x32xf32>
    %170 = vector.broadcast %169 : vector<1x32xf32> to vector<8x32xf32>
    %171 = arith.select %168, %170, %148 : vector<8x32xi1>, vector<8x32xf32>
    %172 = vector.extract_strided_slice %5 {offsets = [7, 0], sizes = [1, 128], strides = [1, 1]} : vector<8x128xf32> to vector<1x128xf32>
    %cst_26 = arith.constant dense<0.000000e+00> : vector<1x128xf32>
    %173 = tpu.matmul %166, %6, %cst_26 {dimension_numbers = #tpu.dot_dimension_numbers<[1], [0], [0], [1], [0, 0, 1, 1], [], []>} : vector<1x32xf32>, vector<32x128xf32>, vector<1x128xf32> -> vector<1x128xf32>
    %174 = arith.addf %172, %173 : vector<1x128xf32>
    %175 = arith.negf %174 : vector<1x128xf32>
    %176 = math.exp %175 : vector<1x128xf32>
    %cst_27 = arith.constant 1.000000e+00 : f32
    %177 = vector.broadcast %cst_27 : f32 to vector<1x128xf32>
    %178 = arith.addf %177, %176 : vector<1x128xf32>
    %179 = arith.divf %177, %178 : vector<1x128xf32>
    %180 = math.tanh %174 : vector<1x128xf32>
    %181 = vector.extract_strided_slice %179 {offsets = [0, 0], sizes = [1, 32], strides = [1, 1]} : vector<1x128xf32> to vector<1x32xf32>
    %182 = vector.extract_strided_slice %179 {offsets = [0, 32], sizes = [1, 32], strides = [1, 1]} : vector<1x128xf32> to vector<1x32xf32>
    %183 = vector.extract_strided_slice %180 {offsets = [0, 64], sizes = [1, 32], strides = [1, 1]} : vector<1x128xf32> to vector<1x32xf32>
    %184 = vector.extract_strided_slice %179 {offsets = [0, 96], sizes = [1, 32], strides = [1, 1]} : vector<1x128xf32> to vector<1x32xf32>
    %185 = arith.mulf %182, %164 : vector<1x32xf32>
    %186 = arith.mulf %181, %183 : vector<1x32xf32>
    %187 = arith.addf %185, %186 : vector<1x32xf32>
    %188 = math.tanh %187 : vector<1x32xf32>
    %189 = arith.mulf %184, %188 : vector<1x32xf32>
    %c7_i32 = arith.constant 7 : i32
    %190 = vector.broadcast %c7_i32 : i32 to vector<8x32xi32>
    %191 = arith.cmpi eq, %7, %190 : vector<8x32xi32>
    %192 = vector.shape_cast %189 : vector<1x32xf32> to vector<1x32xf32>
    %193 = vector.broadcast %192 : vector<1x32xf32> to vector<8x32xf32>
    %194 = arith.select %191, %193, %171 : vector<8x32xi1>, vector<8x32xf32>
    %c0_28 = arith.constant 0 : index
    %c0_29 = arith.constant 0 : index
    %195 = vector.load %arg9[%c0_28, %c0_29] : memref<1x32xf32, #tpu.memory_space<vmem>>, vector<1x32xf32>
    tpu.vector_store %arg9[%c0_28, %c0_29], %189 {strides = array<i32>} : memref<1x32xf32, #tpu.memory_space<vmem>>, vector<1x32xf32>,
    %c0_30 = arith.constant 0 : index
    %c0_31 = arith.constant 0 : index
    %196 = vector.load %arg10[%c0_30, %c0_31] : memref<1x32xf32, #tpu.memory_space<vmem>>, vector<1x32xf32>
    tpu.vector_store %arg10[%c0_30, %c0_31], %187 {strides = array<i32>} : memref<1x32xf32, #tpu.memory_space<vmem>>, vector<1x32xf32>,
    %c0_32 = arith.constant 0 : index
    %c0_33 = arith.constant 0 : index
    %197 = vector.load %arg6[%c0_32, %c0_33] : memref<32x128xf32, #tpu.memory_space<vmem>>, vector<32x128xf32>
    %cst_34 = arith.constant dense<0.000000e+00> : vector<8x128xf32>
    %198 = tpu.matmul %194, %197, %cst_34 {dimension_numbers = #tpu.dot_dimension_numbers<[1], [0], [0], [1], [0, 0, 1, 1], [], []>} : vector<8x32xf32>, vector<32x128xf32>, vector<8x128xf32> -> vector<8x128xf32>
    %c0_35 = arith.constant 0 : index
    %c0_36 = arith.constant 0 : index
    %199 = vector.load %arg7[%c0_35, %c0_36] : memref<1x128xf32, #tpu.memory_space<vmem>>, vector<1x128xf32>
    %200 = vector.broadcast %199 : vector<1x128xf32> to vector<8x128xf32>
    %201 = arith.addf %198, %200 : vector<8x128xf32>
    %cst_37 = arith.constant dense<0xFF800000> : vector<8xf32>
    %202 = vector.multi_reduction <maximumf>, %201, %cst_37 [1] : vector<8x128xf32> to vector<8xf32>
    %203 = vector.shape_cast %202 : vector<8xf32> to vector<8x1xf32>
    %204 = vector.broadcast %203 : vector<8x1xf32> to vector<8x128xf32>
    %205 = arith.subf %201, %204 : vector<8x128xf32>
    %206 = math.exp %205 : vector<8x128xf32>
    %cst_38 = arith.constant dense<0.000000e+00> : vector<8xf32>
    %207 = vector.multi_reduction <add>, %206, %cst_38 [1] : vector<8x128xf32> to vector<8xf32>
    %208 = vector.shape_cast %207 : vector<8xf32> to vector<8x1xf32>
    %209 = math.log %208 : vector<8x1xf32>
    %210 = arith.addf %209, %203 : vector<8x1xf32>
    %211 = vector.broadcast %210 : vector<8x1xf32> to vector<8x128xf32>
    %212 = arith.subf %201, %211 : vector<8x128xf32>
    %c0_39 = arith.constant 0 : index
    %c0_40 = arith.constant 0 : index
    %213 = vector.load %arg8[%c0_39, %c0_40] : memref<8x128xf32, #tpu.memory_space<vmem>>, vector<8x128xf32>
    tpu.vector_store %arg8[%c0_39, %c0_40], %212 {strides = array<i32>} : memref<8x128xf32, #tpu.memory_space<vmem>>, vector<8x128xf32>,
    return
  }
}

</mosaic_0001>

<llo_original>
// kernel: tpu_custom_call.1
$region0: #{tpu_custom_call.1}
  #allocation0 [shape = 'u32[]', space=smem, size = 0x4, offset = 0x4, fixed_abs, tag = 'smem constant byte address 0x4 - core index']
  #allocation1 [shape = 'u32[72,128]{1,0:T(1,128)}', space=vmem, size = 0x9000, scoped, tag = 'internal scratch']
  %s0 = inlined_call_operand.hbm [shape: f32[8,16], index: 0, kind: input, shape index: {}]
  %s1 = inlined_call_operand.hbm [shape: f32[1,32], index: 1, kind: input, shape index: {}]
  %s2 = inlined_call_operand.vmem [shape: f32[1,32], index: 2, kind: input, shape index: {}]
  %s3 = inlined_call_operand.hbm [shape: f32[16,128], index: 3, kind: input, shape index: {}]
  %s4 = inlined_call_operand.hbm [shape: f32[32,128], index: 4, kind: input, shape index: {}]
  %s5 = inlined_call_operand.vmem [shape: f32[1,128], index: 5, kind: input, shape index: {}]
  %s6 = inlined_call_operand.hbm [shape: f32[32,128], index: 6, kind: input, shape index: {}]
  %s7 = inlined_call_operand.vmem [shape: f32[1,128], index: 7, kind: input, shape index: {}]
  %s8 = inlined_call_operand.hbm [shape: f32[8,128], index: 8, kind: output, shape index: {0}]
  %s9 = inlined_call_operand.hbm [shape: f32[1,32], index: 9, kind: output, shape index: {1}]
  %s10 = inlined_call_operand.hbm [shape: f32[1,32], index: 10, kind: output, shape index: {2}]
  %11 = xla_tuple %s8, %s9, %s10
  %s12 = sld [smem:[#allocation0]]
  $region78: #{tpu_custom_call.1} parent=0
    _
  %s14 = ssub.s32 1, %s12
  %s15 = scalar_select 0, %s14, %s12
  $region1: #{tpu_custom_call.1} parent=0
    #allocation2 [shape = 'u8[4096]{0}', space=vmem, size = 0x1000, scoped, tag = 'input window, operand 0, single buffered']
    #allocation3 [shape = 's32[1]{0}', space=sflag, size = 0x4, scoped, tag = 'scoped memory for tpu_custom_call.1']
    #allocation4 [shape = 's32[1]{0}', space=sflag, size = 0x4, scoped, tag = 'scoped memory for tpu_custom_call.1']
    #allocation5 [shape = 'u8[512]{0}', space=vmem, size = 0x400, scoped, tag = 'input window, operand 1, single buffered']
    #allocation6 [shape = 's32[1]{0}', space=sflag, size = 0x4, scoped, tag = 'scoped memory for tpu_custom_call.1']
    #allocation7 [shape = 'u8[8192]{0}', space=vmem, size = 0x2000, scoped, tag = 'input window, operand 3, single buffered']
    #allocation8 [shape = 'u8[16384]{0}', space=vmem, size = 0x4000, scoped, tag = 'input window, operand 4, single buffered']
    #allocation9 [shape = 's32[1]{0}', space=sflag, size = 0x4, scoped, tag = 'scoped memory for tpu_custom_call.1']
    #allocation10 [shape = 'u8[16384]{0}', space=vmem, size = 0x4000, scoped, tag = 'input window, operand 6, single buffered']
    #allocation11 [shape = 'u8[4096]{0}', space=vmem, size = 0x1000, scoped, tag = 'output window, operand 0, single buffered']
    #allocation12 [shape = 'u8[512]{0}', space=vmem, size = 0x400, scoped, tag = 'output window, operand 1, single buffered']
    #allocation13 [shape = 's32[1]{0}', space=sflag, size = 0x4, scoped, tag = 'scoped memory for tpu_custom_call.1']
    #allocation14 [shape = 'u8[512]{0}', space=vmem, size = 0x400, scoped, tag = 'output window, operand 2, single buffered']
    %16 = vsyncpa [#allocation3], 0
    %17 = vsyncpa [#allocation6], 0
    %18 = vsyncpa [#allocation9], 0
    %19 = vsyncpa [#allocation4], 0
    %20 = vsyncpa [#allocation13], 0
    // Predicated region
    $region2: #{tpu_custom_call.1} parent=1 // pred_check
      _
    $region3: #{tpu_custom_call.1} parent=1 // pred_check_branch
      %22 = sbr.rel (0) target = $region5
    $region4: #{tpu_custom_call.1} parent=1 // pred_region
      %24 = vsyncadd [#allocation3], 0
      %s26 = sshll.u32 %s0, 4
      %s27 = int_to_ptr.hbm [resolvable:$true] %s26
      %s28 = sshll.u32 [#allocation2], 4
      %s29 = int_to_ptr.vmem [resolvable:$true] %s28
      %31 = dma.hbm_to_vmem [thread:$0]  %s27, 128, %s29, [#allocation3]
    $region5: #{tpu_custom_call.1} parent=1 // pred_fallthru
      _
    // Predicated region
    $region6: #{tpu_custom_call.1} parent=1 // pred_check
      _
    $region7: #{tpu_custom_call.1} parent=1 // pred_check_branch
      %33 = sbr.rel (0) target = $region9
    $region8: #{tpu_custom_call.1} parent=1 // pred_region
      %35 = vsyncadd [#allocation6], 0
      %s37 = sshll.u32 %s1, 4
      %s38 = int_to_ptr.hbm [resolvable:$true] %s37
      %s39 = sshll.u32 [#allocation5], 4
      %s40 = int_to_ptr.vmem [resolvable:$true] %s39
      %42 = dma.hbm_to_vmem [thread:$0]  %s38, 16, %s40, [#allocation6]
    $region9: #{tpu_custom_call.1} parent=1 // pred_fallthru
      _
    // Predicated region
    $region10: #{tpu_custom_call.1} parent=1 // pred_check
      _
    $region11: #{tpu_custom_call.1} parent=1 // pred_check_branch
      %44 = sbr.rel (0) target = $region13
    $region12: #{tpu_custom_call.1} parent=1 // pred_region
      _
    $region13: #{tpu_custom_call.1} parent=1 // pred_fallthru
      _
    // Predicated region
    $region14: #{tpu_custom_call.1} parent=1 // pred_check
      _
    $region15: #{tpu_custom_call.1} parent=1 // pred_check_branch
      %46 = sbr.rel (0) target = $region17
    $region16: #{tpu_custom_call.1} parent=1 // pred_region
      %48 = vsyncadd [#allocation6], 0
      %s49 = sshll.u32 %s3, 4
      %s50 = int_to_ptr.hbm [resolvable:$true] %s49
      %s51 = sshll.u32 [#allocation7], 4
      %s52 = int_to_ptr.vmem [resolvable:$true] %s51
      %57 = dma.hbm_to_vmem [thread:$0]  %s50, 256, %s52, [#allocation6], 128, 128, 8
    $region17: #{tpu_custom_call.1} parent=1 // pred_fallthru
      _
    // Predicated region
    $region18: #{tpu_custom_call.1} parent=1 // pred_check
      _
    $region19: #{tpu_custom_call.1} parent=1 // pred_check_branch
      %59 = sbr.rel (0) target = $region21
    $region20: #{tpu_custom_call.1} parent=1 // pred_region
      %61 = vsyncadd [#allocation9], 0
      %s62 = sshll.u32 %s4, 4
      %s63 = int_to_ptr.hbm [resolvable:$true] %s62
      %s64 = sshll.u32 [#allocation8], 4
      %s65 = int_to_ptr.vmem [resolvable:$true] %s64
      %70 = dma.hbm_to_vmem [thread:$0]  %s63, 512, %s65, [#allocation9], 128, 128, 8
    $region21: #{tpu_custom_call.1} parent=1 // pred_fallthru
      _
    // Predicated region
    $region22: #{tpu_custom_call.1} parent=1 // pred_check
      _
    $region23: #{tpu_custom_call.1} parent=1 // pred_check_branch
      %72 = sbr.rel (0) target = $region25
    $region24: #{tpu_custom_call.1} parent=1 // pred_region
      _
    $region25: #{tpu_custom_call.1} parent=1 // pred_fallthru
      _
    // Predicated region
    $region26: #{tpu_custom_call.1} parent=1 // pred_check
      _
    $region27: #{tpu_custom_call.1} parent=1 // pred_check_branch
      %74 = sbr.rel (0) target = $region29
    $region28: #{tpu_custom_call.1} parent=1 // pred_region
      %76 = vsyncadd [#allocation9], 0
      %s77 = sshll.u32 %s6, 4
      %s78 = int_to_ptr.hbm [resolvable:$true] %s77
      %s79 = sshll.u32 [#allocation10], 4
      %s80 = int_to_ptr.vmem [resolvable:$true] %s79
      %85 = dma.hbm_to_vmem [thread:$0]  %s78, 512, %s80, [#allocation9], 128, 128, 8
    $region29: #{tpu_custom_call.1} parent=1 // pred_fallthru
      _
    // Predicated region
    $region30: #{tpu_custom_call.1} parent=1 // pred_check
      _
    $region31: #{tpu_custom_call.1} parent=1 // pred_check_branch
      %87 = sbr.rel (0) target = $region33
    $region32: #{tpu_custom_call.1} parent=1 // pred_region
      _
    $region33: #{tpu_custom_call.1} parent=1 // pred_fallthru
      _
    // Predicated region
    $region34: #{tpu_custom_call.1} parent=1 // pred_check
      _
    $region35: #{tpu_custom_call.1} parent=1 // pred_check_branch
      %89 = sbr.rel (0) target = $region37
    $region36: #{tpu_custom_call.1} parent=1 // pred_region
      %91 = dma.done [#allocation3], 128
    $region37: #{tpu_custom_call.1} parent=1 // pred_fallthru
      _
    // Predicated region
    $region38: #{tpu_custom_call.1} parent=1 // pred_check
      _
    $region39: #{tpu_custom_call.1} parent=1 // pred_check_branch
      %93 = sbr.rel (0) target = $region41
    $region40: #{tpu_custom_call.1} parent=1 // pred_region
      %95 = dma.done [#allocation6], 16
    $region41: #{tpu_custom_call.1} parent=1 // pred_fallthru
      _
    // Predicated region
    $region42: #{tpu_custom_call.1} parent=1 // pred_check
      _
    $region43: #{tpu_custom_call.1} parent=1 // pred_check_branch
      %97 = sbr.rel (0) target = $region45
    $region44: #{tpu_custom_call.1} parent=1 // pred_region
      %99 = dma.done [#allocation6], 256
    $region45: #{tpu_custom_call.1} parent=1 // pred_fallthru
      _
    // Predicated region
    $region46: #{tpu_custom_call.1} parent=1 // pred_check
      _
    $region47: #{tpu_custom_call.1} parent=1 // pred_check_branch
      %101 = sbr.rel (0) target = $region49
    $region48: #{tpu_custom_call.1} parent=1 // pred_region
      %103 = dma.done [#allocation9], 512
    $region49: #{tpu_custom_call.1} parent=1 // pred_fallthru
      _
    // Predicated region
    $region50: #{tpu_custom_call.1} parent=1 // pred_check
      _
    $region51: #{tpu_custom_call.1} parent=1 // pred_check_branch
      %105 = sbr.rel (0) target = $region53
    $region52: #{tpu_custom_call.1} parent=1 // pred_region
      %107 = dma.done [#allocation9], 512
    $region53: #{tpu_custom_call.1} parent=1 // pred_fallthru
      _
    %v108 = vld [vmem:[#allocation2] sm:$0xff]
    %v109 = vld [vmem:[#allocation7] sm:$0xff]
    %v110 = vld [vmem:[#allocation7 + $0x8] sm:$0xff]
    %v111 = vld [vmem:[%s5] sm:$0x1]
    %v113 = vperm.slane %v111, 0
    %vm115 = vcmask 130048
    %v117 = vsel %vm115, %v108, 0
    %119 = vmatpush.msra.mxu0 0.0
    %120 = vmatpush.msra.mxu0 0.0
    %121 = vmatpush.msra.mxu0 0.0
    %122 = vmatpush.msra.mxu0 0.0
    %123 = vmatpush.msra.mxu0 0.0
    %124 = vmatpush.msra.mxu0 0.0
    %125 = vmatpush.msra.mxu0 0.0
    %126 = vmatpush.msra.mxu0 0.0
    %127 = vmatpush.msra.mxu0 0.0
    %128 = vmatpush.msra.mxu0 0.0
    %129 = vmatpush.msra.mxu0 0.0
    %130 = vmatpush.msra.mxu0 0.0
    %131 = vmatpush.msra.mxu0 0.0
    %132 = vmatpush.msra.mxu0 0.0
    %133 = vmatpush.msra.mxu0 %v110
    %134 = vmatpush.msra.mxu0 %v109
    %135 = vmatmul.f32.gmra.mxu0 %v117
    %v136 = vpop.f32.mrf.mxu0
    %v137 = vadd.f32 %v113, %v136
    %138 = vdwg.mxu0
    %v139 = vld [vmem:[#allocation8] sm:$0xff]
    %v140 = vld [vmem:[#allocation8 + $0x8] sm:$0xff]
    %v141 = vld [vmem:[#allocation8 + $0x10] sm:$0xff]
    %v142 = vld [vmem:[#allocation8 + $0x18] sm:$0xff]
    %v143 = vlaneseq
    %v144 = vshrl.u32 %v143, 7
    %v145 = vld [vmem:[#allocation5] sm:$0x1]
    %v146 = vld [vmem:[%s2] sm:$0x1]
    %vm147 = vcmask 261120
    %v149 = vsel %vm147, %v145, 0
    %151 = vmatpush.msra.mxu0 0.0
    %152 = vmatpush.msra.mxu0 0.0
    %153 = vmatpush.msra.mxu0 0.0
    %154 = vmatpush.msra.mxu0 0.0
    %155 = vmatpush.msra.mxu0 0.0
    %156 = vmatpush.msra.mxu0 0.0
    %157 = vmatpush.msra.mxu0 0.0
    %158 = vmatpush.msra.mxu0 0.0
    %159 = vmatpush.msra.mxu0 0.0
    %160 = vmatpush.msra.mxu0 0.0
    %161 = vmatpush.msra.mxu0 0.0
    %162 = vmatpush.msra.mxu0 0.0
    %163 = vmatpush.msra.mxu0 %v142
    %164 = vmatpush.msra.mxu0 %v141
    %165 = vmatpush.msra.mxu0 %v140
    %166 = vmatpush.msra.mxu0 %v139
    %167 = vmatmul.f32.gmra.mxu0 %v149
    %v168 = vpop.f32.mrf.mxu0
    %v169 = vadd.f32 0.0, %v168
    %170 = vdwg.mxu0
    %v171 = vadd.f32 %v137, %v169
    %v172 = vxor.u32 %v171, 2147483648
    %v173 = vmul.f32 %v172, 1.442695
    %v174 = vpow.pop %v173
    %v175 = vadd.f32 %v174, 1.0
    %v176 = vrcp.pop %v175
    %v177 = vmul.f32 %v175, %v176
    %v178 = vsub.f32 1.0, %v177
    %v179 = vmul.f32 %v176, %v178
    %v180 = vadd.f32 %v176, %v179
    %vm181 = vweird.f32 %v175
    %vm182 = vweird.f32 %v176
    %vm183 = vmor %vm181, %vm182
    %v184 = vsel %vm183, %v176, %v180
    %v185 = vand.u32 2147483647, %v175
    %vm186 = vcmp.eq.f32.partialorder %v185, 8.507059e+37
    %v187 = vand.u32 %v175, 2147483648
    %v188 = vor.u32 1.1754944e-38, %v187
    %v189 = vsel %vm186, %v188, %v184
    %v190 = vmul.f32 1.0, %v189
    %v191 = vtanh.pop %v171
    %v193 = vperm.slane %v146, 0
    %194 = vrot.lane.b32.xlu0 %v193, 32
    %v195 = vpop.permute.xlu0 %194
    %v197 = vmul.f32 %v190, %v195
    %199 = vrot.lane.b32.xlu0 %v191, 64
    %v200 = vpop.permute.xlu0 %199
    %v202 = vmul.f32 %v190, %v200
    %204 = vrot.lane.b32.xlu0 %v202, 32
    %v205 = vpop.permute.xlu0 %204
    %v207 = vadd.f32 %v197, %v205
    %v208 = vtanh.pop %v207
    %210 = vrot.lane.b32.xlu0 %v208, 64
    %v211 = vpop.permute.xlu0 %210
    %v213 = vmul.f32 %v190, %v211
    %vm214 = vcmp.eq.s32.totalorder %v144, 0
    %v215 = vperm.slane %v213, 0
    %v216 = vsel %vm214, %v215, 0.0
    %218 = vrot.lane.b32.xlu0 %v213, 32
    %v219 = vpop.permute.xlu0 %218
    %v220 = vsel %vm147, %v219, 0
    %222 = vmatpush.msra.mxu0 0.0
    %223 = vmatpush.msra.mxu0 0.0
    %224 = vmatpush.msra.mxu0 0.0
    %225 = vmatpush.msra.mxu0 0.0
    %226 = vmatpush.msra.mxu0 0.0
    %227 = vmatpush.msra.mxu0 0.0
    %228 = vmatpush.msra.mxu0 0.0
    %229 = vmatpush.msra.mxu0 0.0
    %230 = vmatpush.msra.mxu0 0.0
    %231 = vmatpush.msra.mxu0 0.0
    %232 = vmatpush.msra.mxu0 0.0
    %233 = vmatpush.msra.mxu0 0.0
    %234 = vmatpush.msra.mxu0 %v142
    %235 = vmatpush.msra.mxu0 %v141
    %236 = vmatpush.msra.mxu0 %v140
    %237 = vmatpush.msra.mxu0 %v139
    %238 = vmatmul.f32.gmra.mxu0 %v220
    %v239 = vpop.f32.mrf.mxu0
    %v240 = vadd.f32 0.0, %v239
    %241 = vdwg.mxu0
    %v243 = vrot.slane %v240, 7
    %v245 = vadd.f32 %v137, %v243
    %v246 = vxor.u32 %v245, 2147483648
    %v247 = vmul.f32 %v246, 1.442695
    %v248 = vpow.pop %v247
    %v249 = vadd.f32 %v248, 1.0
    %v250 = vrcp.pop %v249
    %v251 = vmul.f32 %v249, %v250
    %v252 = vsub.f32 1.0, %v251
    %v253 = vmul.f32 %v250, %v252
    %v254 = vadd.f32 %v250, %v253
    %vm255 = vweird.f32 %v249
    %vm256 = vweird.f32 %v250
    %vm257 = vmor %vm255, %vm256
    %v258 = vsel %vm257, %v250, %v254
    %v259 = vand.u32 2147483647, %v249
    %vm260 = vcmp.eq.f32.partialorder %v259, 8.507059e+37
    %v261 = vand.u32 %v249, 2147483648
    %v262 = vor.u32 1.1754944e-38, %v261
    %v263 = vsel %vm260, %v262, %v258
    %v264 = vmul.f32 1.0, %v263
    %v265 = vtanh.pop %v245
    %v267 = vrot.slane %v207, 7
    %v269 = vmul.f32 %v264, %v267
    %271 = vrot.lane.b32.xlu0 %v265, 64
    %v272 = vpop.permute.xlu0 %271
    %v274 = vmul.f32 %v264, %v272
    %276 = vrot.lane.b32.xlu0 %v274, 32
    %v277 = vpop.permute.xlu0 %276
    %v279 = vadd.f32 %v269, %v277
    %v280 = vtanh.pop %v279
    %282 = vrot.lane.b32.xlu0 %v280, 64
    %v283 = vpop.permute.xlu0 %282
    %v285 = vmul.f32 %v264, %v283
    %vm286 = vcmp.eq.s32.totalorder %v144, 1
    %v287 = vperm.slane %v285, 1
    %v288 = vsel %vm286, %v287, %v216
    %v290 = vrot.slane %v285, 1
    %291 = vrot.lane.b32.xlu0 %v290, 32
    %v292 = vpop.permute.xlu0 %291
    %v293 = vsel %vm147, %v292, 0
    %295 = vmatpush.msra.mxu0 0.0
    %296 = vmatpush.msra.mxu0 0.0
    %297 = vmatpush.msra.mxu0 0.0
    %298 = vmatpush.msra.mxu0 0.0
    %299 = vmatpush.msra.mxu0 0.0
    %300 = vmatpush.msra.mxu0 0.0
    %301 = vmatpush.msra.mxu0 0.0
    %302 = vmatpush.msra.mxu0 0.0
    %303 = vmatpush.msra.mxu0 0.0
    %304 = vmatpush.msra.mxu0 0.0
    %305 = vmatpush.msra.mxu0 0.0
    %306 = vmatpush.msra.mxu0 0.0
    %307 = vmatpush.msra.mxu0 %v142
    %308 = vmatpush.msra.mxu0 %v141
    %309 = vmatpush.msra.mxu0 %v140
    %310 = vmatpush.msra.mxu0 %v139
    %311 = vmatmul.f32.gmra.mxu0 %v293
    %v312 = vpop.f32.mrf.mxu0
    %v313 = vadd.f32 0.0, %v312
    %314 = vdwg.mxu0
    %v316 = vrot.slane %v313, 6
    %v318 = vadd.f32 %v137, %v316
    %v319 = vxor.u32 %v318, 2147483648
    %v320 = vmul.f32 %v319, 1.442695
    %v321 = vpow.pop %v320
    %v322 = vadd.f32 %v321, 1.0
    %v323 = vrcp.pop %v322
    %v324 = vmul.f32 %v322, %v323
    %v325 = vsub.f32 1.0, %v324
    %v326 = vmul.f32 %v323, %v325
    %v327 = vadd.f32 %v323, %v326
    %vm328 = vweird.f32 %v322
    %vm329 = vweird.f32 %v323
    %vm330 = vmor %vm328, %vm329
    %v331 = vsel %vm330, %v323, %v327
    %v332 = vand.u32 2147483647, %v322
    %vm333 = vcmp.eq.f32.partialorder %v332, 8.507059e+37
    %v334 = vand.u32 %v322, 2147483648
    %v335 = vor.u32 1.1754944e-38, %v334
    %v336 = vsel %vm333, %v335, %v331
    %v337 = vmul.f32 1.0, %v336
    %v338 = vtanh.pop %v318
    %v340 = vrot.slane %v279, 7
    %v342 = vmul.f32 %v337, %v340
    %344 = vrot.lane.b32.xlu0 %v338, 64
    %v345 = vpop.permute.xlu0 %344
    %v347 = vmul.f32 %v337, %v345
    %349 = vrot.lane.b32.xlu0 %v347, 32
    %v350 = vpop.permute.xlu0 %349
    %v352 = vadd.f32 %v342, %v350
    %v353 = vtanh.pop %v352
    %355 = vrot.lane.b32.xlu0 %v353, 64
    %v356 = vpop.permute.xlu0 %355
    %v358 = vmul.f32 %v337, %v356
    %vm359 = vcmp.eq.s32.totalorder %v144, 2
    %v360 = vperm.slane %v358, 2
    %v361 = vsel %vm359, %v360, %v288
    %v363 = vrot.slane %v358, 2
    %364 = vrot.lane.b32.xlu0 %v363, 32
    %v365 = vpop.permute.xlu0 %364
    %v366 = vsel %vm147, %v365, 0
    %368 = vmatpush.msra.mxu0 0.0
    %369 = vmatpush.msra.mxu0 0.0
    %370 = vmatpush.msra.mxu0 0.0
    %371 = vmatpush.msra.mxu0 0.0
    %372 = vmatpush.msra.mxu0 0.0
    %373 = vmatpush.msra.mxu0 0.0
    %374 = vmatpush.msra.mxu0 0.0
    %375 = vmatpush.msra.mxu0 0.0
    %376 = vmatpush.msra.mxu0 0.0
    %377 = vmatpush.msra.mxu0 0.0
    %378 = vmatpush.msra.mxu0 0.0
    %379 = vmatpush.msra.mxu0 0.0
    %380 = vmatpush.msra.mxu0 %v142
    %381 = vmatpush.msra.mxu0 %v141
    %382 = vmatpush.msra.mxu0 %v140
    %383 = vmatpush.msra.mxu0 %v139
    %384 = vmatmul.f32.gmra.mxu0 %v366
    %v385 = vpop.f32.mrf.mxu0
    %v386 = vadd.f32 0.0, %v385
    %387 = vdwg.mxu0
    %v389 = vrot.slane %v386, 5
    %v391 = vadd.f32 %v137, %v389
    %v392 = vxor.u32 %v391, 2147483648
    %v393 = vmul.f32 %v392, 1.442695
    %v394 = vpow.pop %v393
    %v395 = vadd.f32 %v394, 1.0
    %v396 = vrcp.pop %v395
    %v397 = vmul.f32 %v395, %v396
    %v398 = vsub.f32 1.0, %v397
    %v399 = vmul.f32 %v396, %v398
    %v400 = vadd.f32 %v396, %v399
    %vm401 = vweird.f32 %v395
    %vm402 = vweird.f32 %v396
    %vm403 = vmor %vm401, %vm402
    %v404 = vsel %vm403, %v396, %v400
    %v405 = vand.u32 2147483647, %v395
    %vm406 = vcmp.eq.f32.partialorder %v405, 8.507059e+37
    %v407 = vand.u32 %v395, 2147483648
    %v408 = vor.u32 1.1754944e-38, %v407
    %v409 = vsel %vm406, %v408, %v404
    %v410 = vmul.f32 1.0, %v409
    %v411 = vtanh.pop %v391
    %v413 = vrot.slane %v352, 7
    %v415 = vmul.f32 %v410, %v413
    %417 = vrot.lane.b32.xlu0 %v411, 64
    %v418 = vpop.permute.xlu0 %417
    %v420 = vmul.f32 %v410, %v418
    %422 = vrot.lane.b32.xlu0 %v420, 32
    %v423 = vpop.permute.xlu0 %422
    %v425 = vadd.f32 %v415, %v423
    %v426 = vtanh.pop %v425
    %428 = vrot.lane.b32.xlu0 %v426, 64
    %v429 = vpop.permute.xlu0 %428
    %v431 = vmul.f32 %v410, %v429
    %vm432 = vcmp.eq.s32.totalorder %v144, 3
    %v433 = vperm.slane %v431, 3
    %v434 = vsel %vm432, %v433, %v361
    %v436 = vrot.slane %v431, 3
    %437 = vrot.lane.b32.xlu0 %v436, 32
    %v438 = vpop.permute.xlu0 %437
    %v439 = vsel %vm147, %v438, 0
    %441 = vmatpush.msra.mxu0 0.0
    %442 = vmatpush.msra.mxu0 0.0
    %443 = vmatpush.msra.mxu0 0.0
    %444 = vmatpush.msra.mxu0 0.0
    %445 = vmatpush.msra.mxu0 0.0
    %446 = vmatpush.msra.mxu0 0.0
    %447 = vmatpush.msra.mxu0 0.0
    %448 = vmatpush.msra.mxu0 0.0
    %449 = vmatpush.msra.mxu0 0.0
    %450 = vmatpush.msra.mxu0 0.0
    %451 = vmatpush.msra.mxu0 0.0
    %452 = vmatpush.msra.mxu0 0.0
    %453 = vmatpush.msra.mxu0 %v142
    %454 = vmatpush.msra.mxu0 %v141
    %455 = vmatpush.msra.mxu0 %v140
    %456 = vmatpush.msra.mxu0 %v139
    %457 = vmatmul.f32.gmra.mxu0 %v439
    %v458 = vpop.f32.mrf.mxu0
    %v459 = vadd.f32 0.0, %v458
    %460 = vdwg.mxu0
    %v462 = vrot.slane %v459, 4
    %v464 = vadd.f32 %v137, %v462
    %v465 = vxor.u32 %v464, 2147483648
    %v466 = vmul.f32 %v465, 1.442695
    %v467 = vpow.pop %v466
    %v468 = vadd.f32 %v467, 1.0
    %v469 = vrcp.pop %v468
    %v470 = vmul.f32 %v468, %v469
    %v471 = vsub.f32 1.0, %v470
    %v472 = vmul.f32 %v469, %v471
    %v473 = vadd.f32 %v469, %v472
    %vm474 = vweird.f32 %v468
    %vm475 = vweird.f32 %v469
    %vm476 = vmor %vm474, %vm475
    %v477 = vsel %vm476, %v469, %v473
    %v478 = vand.u32 2147483647, %v468
    %vm479 = vcmp.eq.f32.partialorder %v478, 8.507059e+37
    %v480 = vand.u32 %v468, 2147483648
    %v481 = vor.u32 1.1754944e-38, %v480
    %v482 = vsel %vm479, %v481, %v477
    %v483 = vmul.f32 1.0, %v482
    %v484 = vtanh.pop %v464
    %v486 = vrot.slane %v425, 7
    %v488 = vmul.f32 %v483, %v486
    %490 = vrot.lane.b32.xlu0 %v484, 64
    %v491 = vpop.permute.xlu0 %490
    %v493 = vmul.f32 %v483, %v491
    %495 = vrot.lane.b32.xlu0 %v493, 32
    %v496 = vpop.permute.xlu0 %495
    %v498 = vadd.f32 %v488, %v496
    %v499 = vtanh.pop %v498
    %501 = vrot.lane.b32.xlu0 %v499, 64
    %v502 = vpop.permute.xlu0 %501
    %v504 = vmul.f32 %v483, %v502
    %vm505 = vcmp.eq.s32.totalorder %v144, 4
    %v506 = vperm.slane %v504, 4
    %v507 = vsel %vm505, %v506, %v434
    %v509 = vrot.slane %v504, 4
    %510 = vrot.lane.b32.xlu0 %v509, 32
    %v511 = vpop.permute.xlu0 %510
    %v512 = vsel %vm147, %v511, 0
    %514 = vmatpush.msra.mxu0 0.0
    %515 = vmatpush.msra.mxu0 0.0
    %516 = vmatpush.msra.mxu0 0.0
    %517 = vmatpush.msra.mxu0 0.0
    %518 = vmatpush.msra.mxu0 0.0
    %519 = vmatpush.msra.mxu0 0.0
    %520 = vmatpush.msra.mxu0 0.0
    %521 = vmatpush.msra.mxu0 0.0
    %522 = vmatpush.msra.mxu0 0.0
    %523 = vmatpush.msra.mxu0 0.0
    %524 = vmatpush.msra.mxu0 0.0
    %525 = vmatpush.msra.mxu0 0.0
    %526 = vmatpush.msra.mxu0 %v142
    %527 = vmatpush.msra.mxu0 %v141
    %528 = vmatpush.msra.mxu0 %v140
    %529 = vmatpush.msra.mxu0 %v139
    %530 = vmatmul.f32.gmra.mxu0 %v512
    %v531 = vpop.f32.mrf.mxu0
    %v532 = vadd.f32 0.0, %v531
    %533 = vdwg.mxu0
    %v535 = vrot.slane %v532, 3
    %v537 = vadd.f32 %v137, %v535
    %v538 = vxor.u32 %v537, 2147483648
    %v539 = vmul.f32 %v538, 1.442695
    %v540 = vpow.pop %v539
    %v541 = vadd.f32 %v540, 1.0
    %v542 = vrcp.pop %v541
    %v543 = vmul.f32 %v541, %v542
    %v544 = vsub.f32 1.0, %v543
    %v545 = vmul.f32 %v542, %v544
    %v546 = vadd.f32 %v542, %v545
    %vm547 = vweird.f32 %v541
    %vm548 = vweird.f32 %v542
    %vm549 = vmor %vm547, %vm548
    %v550 = vsel %vm549, %v542, %v546
    %v551 = vand.u32 2147483647, %v541
    %vm552 = vcmp.eq.f32.partialorder %v551, 8.507059e+37
    %v553 = vand.u32 %v541, 2147483648
    %v554 = vor.u32 1.1754944e-38, %v553
    %v555 = vsel %vm552, %v554, %v550
    %v556 = vmul.f32 1.0, %v555
    %v557 = vtanh.pop %v537
    %v559 = vrot.slane %v498, 7
    %v561 = vmul.f32 %v556, %v559
    %563 = vrot.lane.b32.xlu0 %v557, 64
    %v564 = vpop.permute.xlu0 %563
    %v566 = vmul.f32 %v556, %v564
    %568 = vrot.lane.b32.xlu0 %v566, 32
    %v569 = vpop.permute.xlu0 %568
    %v571 = vadd.f32 %v561, %v569
    %v572 = vtanh.pop %v571
    %574 = vrot.lane.b32.xlu0 %v572, 64
    %v575 = vpop.permute.xlu0 %574
    %v577 = vmul.f32 %v556, %v575
    %vm578 = vcmp.eq.s32.totalorder %v144, 5
    %v579 = vperm.slane %v577, 5
    %v580 = vsel %vm578, %v579, %v507
    %v582 = vrot.slane %v577, 5
    %583 = vrot.lane.b32.xlu0 %v582, 32
    %v584 = vpop.permute.xlu0 %583
    %v585 = vsel %vm147, %v584, 0
    %587 = vmatpush.msra.mxu0 0.0
    %588 = vmatpush.msra.mxu0 0.0
    %589 = vmatpush.msra.mxu0 0.0
    %590 = vmatpush.msra.mxu0 0.0
    %591 = vmatpush.msra.mxu0 0.0
    %592 = vmatpush.msra.mxu0 0.0
    %593 = vmatpush.msra.mxu0 0.0
    %594 = vmatpush.msra.mxu0 0.0
    %595 = vmatpush.msra.mxu0 0.0
    %596 = vmatpush.msra.mxu0 0.0
    %597 = vmatpush.msra.mxu0 0.0
    %598 = vmatpush.msra.mxu0 0.0
    %599 = vmatpush.msra.mxu0 %v142
    %600 = vmatpush.msra.mxu0 %v141
    %601 = vmatpush.msra.mxu0 %v140
    %602 = vmatpush.msra.mxu0 %v139
    %603 = vmatmul.f32.gmra.mxu0 %v585
    %v604 = vpop.f32.mrf.mxu0
    %v605 = vadd.f32 0.0, %v604
    %606 = vdwg.mxu0
    %v608 = vrot.slane %v605, 2
    %v610 = vadd.f32 %v137, %v608
    %v611 = vxor.u32 %v610, 2147483648
    %v612 = vmul.f32 %v611, 1.442695
    %v613 = vpow.pop %v612
    %v614 = vadd.f32 %v613, 1.0
    %v615 = vrcp.pop %v614
    %v616 = vmul.f32 %v614, %v615
    %v617 = vsub.f32 1.0, %v616
    %v618 = vmul.f32 %v615, %v617
    %v619 = vadd.f32 %v615, %v618
    %vm620 = vweird.f32 %v614
    %vm621 = vweird.f32 %v615
    %vm622 = vmor %vm620, %vm621
    %v623 = vsel %vm622, %v615, %v619
    %v624 = vand.u32 2147483647, %v614
    %vm625 = vcmp.eq.f32.partialorder %v624, 8.507059e+37
    %v626 = vand.u32 %v614, 2147483648
    %v627 = vor.u32 1.1754944e-38, %v626
    %v628 = vsel %vm625, %v627, %v623
    %v629 = vmul.f32 1.0, %v628
    %v630 = vtanh.pop %v610
    %v632 = vrot.slane %v571, 7
    %v634 = vmul.f32 %v629, %v632
    %636 = vrot.lane.b32.xlu0 %v630, 64
    %v637 = vpop.permute.xlu0 %636
    %v639 = vmul.f32 %v629, %v637
    %641 = vrot.lane.b32.xlu0 %v639, 32
    %v642 = vpop.permute.xlu0 %641
    %v644 = vadd.f32 %v634, %v642
    %v645 = vtanh.pop %v644
    %647 = vrot.lane.b32.xlu0 %v645, 64
    %v648 = vpop.permute.xlu0 %647
    %v650 = vmul.f32 %v629, %v648
    %vm651 = vcmp.eq.s32.totalorder %v144, 6
    %v652 = vperm.slane %v650, 6
    %v653 = vsel %vm651, %v652, %v580
    %v655 = vrot.slane %v650, 6
    %656 = vrot.lane.b32.xlu0 %v655, 32
    %v657 = vpop.permute.xlu0 %656
    %v658 = vsel %vm147, %v657, 0
    %660 = vmatpush.msra.mxu0 0.0
    %661 = vmatpush.msra.mxu0 0.0
    %662 = vmatpush.msra.mxu0 0.0
    %663 = vmatpush.msra.mxu0 0.0
    %664 = vmatpush.msra.mxu0 0.0
    %665 = vmatpush.msra.mxu0 0.0
    %666 = vmatpush.msra.mxu0 0.0
    %667 = vmatpush.msra.mxu0 0.0
    %668 = vmatpush.msra.mxu0 0.0
    %669 = vmatpush.msra.mxu0 0.0
    %670 = vmatpush.msra.mxu0 0.0
    %671 = vmatpush.msra.mxu0 0.0
    %672 = vmatpush.msra.mxu0 %v142
    %673 = vmatpush.msra.mxu0 %v141
    %674 = vmatpush.msra.mxu0 %v140
    %675 = vmatpush.msra.mxu0 %v139
    %676 = vmatmul.f32.gmra.mxu0 %v658
    %v677 = vpop.f32.mrf.mxu0
    %v678 = vadd.f32 0.0, %v677
    %679 = vdwg.mxu0
    %v681 = vrot.slane %v678, 1
    %v683 = vadd.f32 %v137, %v681
    %v684 = vxor.u32 %v683, 2147483648
    %v685 = vmul.f32 %v684, 1.442695
    %v686 = vpow.pop %v685
    %v687 = vadd.f32 %v686, 1.0
    %v688 = vrcp.pop %v687
    %v689 = vmul.f32 %v687, %v688
    %v690 = vsub.f32 1.0, %v689
    %v691 = vmul.f32 %v688, %v690
    %v692 = vadd.f32 %v688, %v691
    %vm693 = vweird.f32 %v687
    %vm694 = vweird.f32 %v688
    %vm695 = vmor %vm693, %vm694
    %v696 = vsel %vm695, %v688, %v692
    %v697 = vand.u32 2147483647, %v687
    %vm698 = vcmp.eq.f32.partialorder %v697, 8.507059e+37
    %v699 = vand.u32 %v687, 2147483648
    %v700 = vor.u32 1.1754944e-38, %v699
    %v701 = vsel %vm698, %v700, %v696
    %v702 = vmul.f32 1.0, %v701
    %v703 = vtanh.pop %v683
    %v705 = vrot.slane %v644, 7
    %v707 = vmul.f32 %v702, %v705
    %709 = vrot.lane.b32.xlu0 %v703, 64
    %v710 = vpop.permute.xlu0 %709
    %v712 = vmul.f32 %v702, %v710
    %714 = vrot.lane.b32.xlu0 %v712, 32
    %v715 = vpop.permute.xlu0 %714
    %v717 = vadd.f32 %v707, %v715
    %v718 = vtanh.pop %v717
    %720 = vrot.lane.b32.xlu0 %v718, 64
    %v721 = vpop.permute.xlu0 %720
    %v723 = vmul.f32 %v702, %v721
    %vm724 = vcmp.eq.s32.totalorder %v144, 7
    %v725 = vperm.slane %v723, 7
    %v726 = vsel %vm724, %v725, %v653
    %728 = vrot.lane.b32.xlu0 %v723, 32
    %v729 = vpop.permute.xlu0 %728
    %vm731 = vcmask 261127
    %732 = vst.msk [vmem:[#allocation12 - $0x7] sm:$0x80] %vm731, %v729
    %734 = vrot.lane.b32.xlu0 %v717, 96
    %v735 = vpop.permute.xlu0 %734
    %737 = vst.msk [vmem:[#allocation14 - $0x7] sm:$0x80] %vm731, %v735
    %v738 = vld [vmem:[#allocation10] sm:$0xff]
    %v739 = vld [vmem:[#allocation10 + $0x8] sm:$0xff]
    %v740 = vld [vmem:[#allocation10 + $0x10] sm:$0xff]
    %v741 = vld [vmem:[#allocation10 + $0x18] sm:$0xff]
    %v742 = vld [vmem:[%s7] sm:$0x1]
    %v744 = vperm.slane %v742, 0
    %747 = vrot.lane.b32.xlu0 %v726, 32
    %v748 = vpop.permute.xlu0 %747
    %v749 = vsel %vm147, %v748, 0
    %751 = vmatpush.msra.mxu0 0.0
    %752 = vmatpush.msra.mxu0 0.0
    %753 = vmatpush.msra.mxu0 0.0
    %754 = vmatpush.msra.mxu0 0.0
    %755 = vmatpush.msra.mxu0 0.0
    %756 = vmatpush.msra.mxu0 0.0
    %757 = vmatpush.msra.mxu0 0.0
    %758 = vmatpush.msra.mxu0 0.0
    %759 = vmatpush.msra.mxu0 0.0
    %760 = vmatpush.msra.mxu0 0.0
    %761 = vmatpush.msra.mxu0 0.0
    %762 = vmatpush.msra.mxu0 0.0
    %763 = vmatpush.msra.mxu0 %v741
    %764 = vmatpush.msra.mxu0 %v740
    %765 = vmatpush.msra.mxu0 %v739
    %766 = vmatpush.msra.mxu0 %v738
    %767 = vmatmul.f32.gmra.mxu0 %v749
    %v768 = vpop.f32.mrf.mxu0
    %v769 = vadd.f32 %v744, %v768
    %770 = vdwg.mxu0
    %771 = vmax.xlane.f32.xlu0 %v769
    %v772 = vpop.xlane.xlu0 %771
    %v773 = vsub.f32 %v769, %v772
    %v774 = vmul.f32 %v773, 1.442695
    %v775 = vpow.pop %v774
    %776 = vadd.xlane.f32.xlu0 %v775
    %v777 = vpop.xlane.xlu0 %776
    %v778 = vlog2.pop %v777
    %v779 = vmul.f32 %v778, 0.6931472
    %v780 = vadd.f32 %v779, %v772
    %v781 = vsub.f32 %v769, %v780
    %782 = vst [vmem:[#allocation11] sm:$0xff] %v781
    // Predicated region
    $region54: #{tpu_custom_call.1} parent=1 // pred_check
      _
    $region55: #{tpu_custom_call.1} parent=1 // pred_check_branch
      %784 = sbr.rel (0) target = $region57
    $region56: #{tpu_custom_call.1} parent=1 // pred_region
      %786 = vsyncadd [#allocation4], 0
      %s788 = sshll.u32 [#allocation11], 4
      %s789 = int_to_ptr.vmem [resolvable:$true] %s788
      %s790 = sshll.u32 %s8, 4
      %s791 = int_to_ptr.hbm [resolvable:$true] %s790
      %793 = dma.vmem_to_hbm [thread:$0]  %s789, 128, %s791, [#allocation4]
    $region57: #{tpu_custom_call.1} parent=1 // pred_fallthru
      _
    // Predicated region
    $region58: #{tpu_custom_call.1} parent=1 // pred_check
      _
    $region59: #{tpu_custom_call.1} parent=1 // pred_check_branch
      %795 = sbr.rel (0) target = $region61
    $region60: #{tpu_custom_call.1} parent=1 // pred_region
      %797 = vsyncadd [#allocation13], 0
      %s799 = sshll.u32 [#allocation12], 4
      %s800 = int_to_ptr.vmem [resolvable:$true] %s799
      %s801 = sshll.u32 %s9, 4
      %s802 = int_to_ptr.hbm [resolvable:$true] %s801
      %804 = dma.vmem_to_hbm [thread:$0]  %s800, 16, %s802, [#allocation13]
    $region61: #{tpu_custom_call.1} parent=1 // pred_fallthru
      _
    // Predicated region
    $region62: #{tpu_custom_call.1} parent=1 // pred_check
      _
    $region63: #{tpu_custom_call.1} parent=1 // pred_check_branch
      %806 = sbr.rel (0) target = $region65
    $region64: #{tpu_custom_call.1} parent=1 // pred_region
      %808 = vsyncadd [#allocation13], 0
      %s810 = sshll.u32 [#allocation14], 4
      %s811 = int_to_ptr.vmem [resolvable:$true] %s810
      %s812 = sshll.u32 %s10, 4
      %s813 = int_to_ptr.hbm [resolvable:$true] %s812
      %815 = dma.vmem_to_hbm [thread:$0]  %s811, 16, %s813, [#allocation13]
    $region65: #{tpu_custom_call.1} parent=1 // pred_fallthru
      _
    // Predicated region
    $region66: #{tpu_custom_call.1} parent=1 // pred_check
      _
    $region67: #{tpu_custom_call.1} parent=1 // pred_check_branch
      %817 = sbr.rel (0) target = $region69
    $region68: #{tpu_custom_call.1} parent=1 // pred_region
      %819 = dma.done [#allocation4], 128
    $region69: #{tpu_custom_call.1} parent=1 // pred_fallthru
      _
    // Predicated region
    $region70: #{tpu_custom_call.1} parent=1 // pred_check
      _
    $region71: #{tpu_custom_call.1} parent=1 // pred_check_branch
      %821 = sbr.rel (0) target = $region73
    $region72: #{tpu_custom_call.1} parent=1 // pred_region
      %823 = dma.done [#allocation13], 16
    $region73: #{tpu_custom_call.1} parent=1 // pred_fallthru
      _
    // Predicated region
    $region74: #{tpu_custom_call.1} parent=1 // pred_check
      _
    $region75: #{tpu_custom_call.1} parent=1 // pred_check_branch
      %825 = sbr.rel (0) target = $region77
    $region76: #{tpu_custom_call.1} parent=1 // pred_region
      %827 = dma.done [#allocation13], 16
    $region77: #{tpu_custom_call.1} parent=1 // pred_fallthru
      _
    %828 = vsyncpa [#allocation3], 1
    %829 = vsyncpa [#allocation6], 1
    %830 = vsyncpa [#allocation9], 1
    %831 = vsyncpa [#allocation4], 1
    %832 = vsyncpa [#allocation13], 1

</llo_original>
